<compile_context>
chip_gen: v7x
topology: tpu7x:2x2x1
jax: 0.10.0
libtpu: 0.0.40
codegen_flags: <defaults>
</compile_context>

<pallas_src>
import jax
import jax.numpy as jnp
import numpy as np
from jax.experimental import pallas as pl
from jax.experimental.pallas import tpu as pltpu


def _round_up(n, m):
    return ((n + m - 1) // m) * m


def bahdanau_kernel(qp_ref, we_ref, pk_ref, v_ref, mask_ref, ctx_ref, alpha_ref):
    # qp_ref:    (TB, H)      projected query (query @ Wq^T, hoisted to wrapper)
    # we_ref:    (1, H)       energy-layer weight
    # pk_ref:    (TB, S, H)   proj_key, natural layout
    # v_ref:     (TB, S, V)   value, natural layout
    # mask_ref:  (TB, S)      int32, 0 = padded position
    # ctx_ref:   (TB, Vp)     lane-padded context output (Vp = round_up(V, 128))
    # alpha_ref: (TB, Sp)     lane-padded alphas output  (Sp = round_up(S, 128))
    qp = qp_ref[...].astype(jnp.float32)
    we = we_ref[...].astype(jnp.float32)
    pk = pk_ref[...].astype(jnp.float32)
    v = v_ref[...].astype(jnp.float32)
    mask = mask_ref[...]

    _tb, s, h = pk.shape
    vdim = v.shape[-1]

    # energy features: broadcast (TB,1,H) + (TB,S,H), tanh on the EUP.
    e = jnp.tanh(qp[:, None, :] + pk)                        # (TB, S, H)
    # scores: VPU multiply + cross-lane reduce over H (no M=1 MXU matmul).
    scores = jnp.sum(e * we.reshape(1, 1, h), axis=-1)       # (TB, S)
    # masking (mask == 0 -> -inf).  NOTE: like the PyTorch module, a row with
    # no valid positions at all yields NaN alphas (softmax over all -inf).
    scores = jnp.where(mask == 0, -jnp.inf, scores)
    # softmax along the sequence (lane) axis.
    m = jnp.max(scores, axis=-1, keepdims=True)
    p = jnp.exp(scores - m)
    denom = jnp.sum(p, axis=-1, keepdims=True)
    alphas = p * pl.reciprocal(denom, approx=False)          # (TB, S)
    # context: VPU multiply + cross-sublane reduce over S (no M=1 MXU matmul).
    ctx = jnp.sum(alphas[:, :, None] * v, axis=1)            # (TB, V)

    # Lane-dense writeback: the output arrays have a last dim that is a
    # multiple of 128, so the HBM writeback DMA is unmasked.  Zero-fill the
    # padded slab (full unmasked store), then drop the payload into the
    # leading lanes.
    if s == alpha_ref.shape[-1]:
        alpha_ref[...] = alphas.astype(alpha_ref.dtype)
    else:
        alpha_ref[...] = jnp.zeros_like(alpha_ref)
        alpha_ref[:, :s] = alphas.astype(alpha_ref.dtype)
    if vdim == ctx_ref.shape[-1]:
        ctx_ref[...] = ctx.astype(ctx_ref.dtype)
    else:
        ctx_ref[...] = jnp.zeros_like(ctx_ref)
        ctx_ref[:, :vdim] = ctx.astype(ctx_ref.dtype)


def bahdanau_attention(query, proj_key, value, mask, Wq, We, *, batch_block=64):
    """query (B,1,Q), proj_key (B,S,H), value (B,S,V), mask (B,S),
    Wq (H,Q), We (1,H) -> (context (B,1,V), alphas (B,1,S))."""
    B, _, Q = query.shape
    _, S, H = proj_key.shape
    V = value.shape[-1]

    # Hoisted query projection: one XLA GEMM over the whole batch.
    qp = jnp.einsum('bq,hq->bh', query[:, 0, :].astype(jnp.float32),
                    Wq.astype(jnp.float32))                     # (B, H)
    mask2 = mask.astype(jnp.int32)                              # (B, S)

    # Batch tile: everything in one grid step when B is small; otherwise
    # multiple-of-8 blocks (sublane constraint), which also lets several
    # "parallel" blocks shard across the two TensorCores of a v7x chip.
    assert batch_block % 8 == 0
    block_b = B if B <= batch_block else batch_block
    grid = (pl.cdiv(B, block_b),)

    S_pad = _round_up(S, 128)   # lane-dense output slabs
    V_pad = _round_up(V, 128)

    out_shapes = (
        jax.ShapeDtypeStruct((B, V_pad), jnp.float32),   # context (padded)
        jax.ShapeDtypeStruct((B, S_pad), jnp.float32),   # alphas  (padded)
    )

    ctx_pad, alpha_pad = pl.pallas_call(
        bahdanau_kernel,
        out_shape=out_shapes,
        grid=grid,
        in_specs=[
            pl.BlockSpec((block_b, H), lambda i: (i, 0)),         # q'
            pl.BlockSpec((1, H), lambda i: (0, 0)),               # We (shared)
            pl.BlockSpec((block_b, S, H), lambda i: (i, 0, 0)),   # proj_key
            pl.BlockSpec((block_b, S, V), lambda i: (i, 0, 0)),   # value
            pl.BlockSpec((block_b, S), lambda i: (i, 0)),         # mask
        ],
        out_specs=(
            pl.BlockSpec((block_b, V_pad), lambda i: (i, 0)),     # context
            pl.BlockSpec((block_b, S_pad), lambda i: (i, 0)),     # alphas
        ),
        compiler_params=pltpu.CompilerParams(
            dimension_semantics=("parallel",)),
    )(qp, We, proj_key, value, mask2)

    ctx = ctx_pad[:, :V] if V_pad != V else ctx_pad
    alphas = alpha_pad[:, :S] if S_pad != S else alpha_pad
    return ctx.reshape(B, 1, V), alphas.reshape(B, 1, S)


def reference(query, proj_key, value, mask, Wq, We):
    q = jnp.einsum('btq,hq->bth', query, Wq)                          # (B,1,H)
    scores = jnp.einsum('bsh,oh->bso', jnp.tanh(q + proj_key), We)    # (B,S,1)
    scores = jnp.swapaxes(scores, 1, 2)                               # (B,1,S)
    scores = jnp.where(mask[:, None, :] == 0, -jnp.inf, scores)
    alphas = jax.nn.softmax(scores, axis=-1)
    context = jnp.einsum('bts,bsv->btv', alphas, value)
    return context, alphas


if __name__ == "__main__":
    hidden = 32
    query_size = hidden          # default: query_size = hidden_size
    B, S = 2, 8

    key = jax.random.PRNGKey(0)
    k1, k2, k3, k4, k5 = jax.random.split(key, 5)

    # Deterministic parameter init (PyTorch nn.Linear weight layout: (out, in))
    Wq = (jax.random.uniform(k1, (hidden, query_size), jnp.float32,
                             minval=-1.0, maxval=1.0) / np.sqrt(query_size)
          ).astype(jnp.float32)
    We = (jax.random.uniform(k2, (1, hidden), jnp.float32,
                             minval=-1.0, maxval=1.0) / np.sqrt(hidden)
          ).astype(jnp.float32)
    # TODO(synk): self.key_layer (key_size -> hidden) is defined in __init__
    # but never used in forward (proj_key is precomputed), so it is omitted.

    query = jax.random.normal(k3, (B, 1, query_size), jnp.float32)
    proj_key = jax.random.normal(k4, (B, S, hidden), jnp.float32)
    value = jax.random.normal(k5, (B, S, 2 * hidden), jnp.float32)
    # mask: 0 = padded position; each row has at least one valid token.
    lengths = jnp.array([S, 5], dtype=jnp.int32)
    mask = (jnp.arange(S)[None, :] < lengths[:, None]).astype(jnp.int32)

    ctx, alphas = bahdanau_attention(query, proj_key, value, mask, Wq, We)
    jax.block_until_ready((ctx, alphas))

    ctx_ref, alphas_ref = reference(query, proj_key, value, mask, Wq, We)
    np.testing.assert_allclose(np.asarray(ctx), np.asarray(ctx_ref),
                               rtol=1e-5, atol=1e-5)
    np.testing.assert_allclose(np.asarray(alphas), np.asarray(alphas_ref),
                               rtol=1e-5, atol=1e-5)
    print("KERNEL_OK")
</pallas_src>

<mosaic_0001>
module attributes {stable_mosaic.version = 11 : i64} {
  func.func @bahdanau_kernel(%arg0: i32, %arg1: memref<2x32xf32, #tpu.memory_space<vmem>>, %arg2: memref<1x32xf32, #tpu.memory_space<vmem>>, %arg3: memref<2x8x32xf32, #tpu.memory_space<vmem>>, %arg4: memref<2x8x64xf32, #tpu.memory_space<vmem>>, %arg5: memref<2x8xi32, #tpu.memory_space<vmem>>, %arg6: memref<2x128xf32, #tpu.memory_space<vmem>>, %arg7: memref<2x128xf32, #tpu.memory_space<vmem>>) attributes {dimension_semantics = [#tpu.dimension_semantics<parallel>], iteration_bounds = array<i64: 1>, scalar_prefetch = 0 : i64, scratch_operands = 0 : i64, tpu.core_type = #tpu.core_type<tc>, window_params = [{transform_indices = @transform_0, window_bounds = array<i64: 2, 32>}, {pipeline_mode = #tpu.pipeline_mode<synchronous>, transform_indices = @transform_1, window_bounds = array<i64: 1, 32>}, {transform_indices = @transform_2, window_bounds = array<i64: 2, 8, 32>}, {transform_indices = @transform_3, window_bounds = array<i64: 2, 8, 64>}, {transform_indices = @transform_4, window_bounds = array<i64: 2, 8>}, {transform_indices = @transform_5, window_bounds = array<i64: 2, 128>}, {transform_indices = @transform_6, window_bounds = array<i64: 2, 128>}]} {
    %c0 = arith.constant 0 : index
    %c0_0 = arith.constant 0 : index
    %0 = vector.load %arg1[%c0, %c0_0] : memref<2x32xf32, #tpu.memory_space<vmem>>, vector<2x32xf32>
    %c0_1 = arith.constant 0 : index
    %c0_2 = arith.constant 0 : index
    %1 = vector.load %arg2[%c0_1, %c0_2] : memref<1x32xf32, #tpu.memory_space<vmem>>, vector<1x32xf32>
    %c0_3 = arith.constant 0 : index
    %c0_4 = arith.constant 0 : index
    %c0_5 = arith.constant 0 : index
    %2 = vector.load %arg3[%c0_3, %c0_4, %c0_5] : memref<2x8x32xf32, #tpu.memory_space<vmem>>, vector<2x8x32xf32>
    %c0_6 = arith.constant 0 : index
    %c0_7 = arith.constant 0 : index
    %c0_8 = arith.constant 0 : index
    %3 = vector.load %arg4[%c0_6, %c0_7, %c0_8] : memref<2x8x64xf32, #tpu.memory_space<vmem>>, vector<2x8x64xf32>
    %c0_9 = arith.constant 0 : index
    %c0_10 = arith.constant 0 : index
    %4 = vector.load %arg5[%c0_9, %c0_10] : memref<2x8xi32, #tpu.memory_space<vmem>>, vector<2x8xi32>
    %5 = vector.shape_cast %0 : vector<2x32xf32> to vector<2x1x32xf32>
    %6 = vector.broadcast %5 : vector<2x1x32xf32> to vector<2x8x32xf32>
    %7 = arith.addf %6, %2 : vector<2x8x32xf32>
    %8 = math.tanh %7 : vector<2x8x32xf32>
    %9 = vector.shape_cast %1 : vector<1x32xf32> to vector<1x1x32xf32>
    %10 = vector.broadcast %9 : vector<1x1x32xf32> to vector<2x8x32xf32>
    %11 = arith.mulf %8, %10 : vector<2x8x32xf32>
    %cst = arith.constant dense<0.000000e+00> : vector<2x8xf32>
    %12 = vector.multi_reduction <add>, %11, %cst [2] : vector<2x8x32xf32> to vector<2x8xf32>
    %c0_i32 = arith.constant 0 : i32
    %13 = vector.broadcast %c0_i32 : i32 to vector<2x8xi32>
    %14 = arith.cmpi eq, %4, %13 : vector<2x8xi32>
    %cst_11 = arith.constant 0xFF800000 : f32
    %15 = vector.broadcast %cst_11 : f32 to vector<2x8xf32>
    %16 = arith.select %14, %15, %12 : vector<2x8xi1>, vector<2x8xf32>
    %cst_12 = arith.constant dense<0xFF800000> : vector<2xf32>
    %17 = vector.multi_reduction <maximumf>, %16, %cst_12 [1] : vector<2x8xf32> to vector<2xf32>
    %18 = vector.shape_cast %17 : vector<2xf32> to vector<2x1xf32>
    %19 = vector.broadcast %18 : vector<2x1xf32> to vector<2x8xf32>
    %20 = arith.subf %16, %19 : vector<2x8xf32>
    %21 = math.exp %20 : vector<2x8xf32>
    %cst_13 = arith.constant dense<0.000000e+00> : vector<2xf32>
    %22 = vector.multi_reduction <add>, %21, %cst_13 [1] : vector<2x8xf32> to vector<2xf32>
    %23 = vector.shape_cast %22 : vector<2xf32> to vector<2x1xf32>
    %24 = tpu.reciprocal %23 : vector<2x1xf32> -> vector<2x1xf32>
    %25 = vector.broadcast %24 : vector<2x1xf32> to vector<2x8xf32>
    %26 = arith.mulf %21, %25 : vector<2x8xf32>
    %27 = vector.shape_cast %26 : vector<2x8xf32> to vector<2x8x1xf32>
    %28 = vector.broadcast %27 : vector<2x8x1xf32> to vector<2x8x64xf32>
    %29 = arith.mulf %28, %3 : vector<2x8x64xf32>
    %cst_14 = arith.constant dense<0.000000e+00> : vector<2x64xf32>
    %30 = vector.multi_reduction <add>, %29, %cst_14 [1] : vector<2x8x64xf32> to vector<2x64xf32>
    %cst_15 = arith.constant 0.000000e+00 : f32
    %31 = vector.broadcast %cst_15 : f32 to vector<2x128xf32>
    %c0_16 = arith.constant 0 : index
    %c0_17 = arith.constant 0 : index
    %32 = vector.load %arg7[%c0_16, %c0_17] : memref<2x128xf32, #tpu.memory_space<vmem>>, vector<2x128xf32>
    tpu.vector_store %arg7[%c0_16, %c0_17], %31 {strides = array<i32>} : memref<2x128xf32, #tpu.memory_space<vmem>>, vector<2x128xf32>,
    %c0_18 = arith.constant 0 : index
    %c0_19 = arith.constant 0 : index
    %33 = vector.load %arg7[%c0_18, %c0_19] : memref<2x128xf32, #tpu.memory_space<vmem>>, vector<2x8xf32>
    tpu.vector_store %arg7[%c0_18, %c0_19], %26 {strides = array<i32>} : memref<2x128xf32, #tpu.memory_space<vmem>>, vector<2x8xf32>,
    %cst_20 = arith.constant 0.000000e+00 : f32
    %34 = vector.broadcast %cst_20 : f32 to vector<2x128xf32>
    %c0_21 = arith.constant 0 : index
    %c0_22 = arith.constant 0 : index
    %35 = vector.load %arg6[%c0_21, %c0_22] : memref<2x128xf32, #tpu.memory_space<vmem>>, vector<2x128xf32>
    tpu.vector_store %arg6[%c0_21, %c0_22], %34 {strides = array<i32>} : memref<2x128xf32, #tpu.memory_space<vmem>>, vector<2x128xf32>,
    %c0_23 = arith.constant 0 : index
    %c0_24 = arith.constant 0 : index
    %36 = vector.load %arg6[%c0_23, %c0_24] : memref<2x128xf32, #tpu.memory_space<vmem>>, vector<2x64xf32>
    tpu.vector_store %arg6[%c0_23, %c0_24], %30 {strides = array<i32>} : memref<2x128xf32, #tpu.memory_space<vmem>>, vector<2x64xf32>,
    return
  }
  func.func @transform_0(%arg0: i32) -> (i32, i32) {
    %c0_i32 = arith.constant 0 : i32
    %c0_i32_0 = arith.constant 0 : i32
    return %arg0, %c0_i32 : i32, i32
  }
  func.func @transform_1(%arg0: i32) -> (i32, i32) {
    %c0_i32 = arith.constant 0 : i32
    %c0_i32_0 = arith.constant 0 : i32
    %c0_i32_1 = arith.constant 0 : i32
    return %c0_i32, %c0_i32_0 : i32, i32
  }
  func.func @transform_2(%arg0: i32) -> (i32, i32, i32) {
    %c0_i32 = arith.constant 0 : i32
    %c0_i32_0 = arith.constant 0 : i32
    %c0_i32_1 = arith.constant 0 : i32
    return %arg0, %c0_i32, %c0_i32_0 : i32, i32, i32
  }
  func.func @transform_3(%arg0: i32) -> (i32, i32, i32) {
    %c0_i32 = arith.constant 0 : i32
    %c0_i32_0 = arith.constant 0 : i32
    %c0_i32_1 = arith.constant 0 : i32
    return %arg0, %c0_i32, %c0_i32_0 : i32, i32, i32
  }
  func.func @transform_4(%arg0: i32) -> (i32, i32) {
    %c0_i32 = arith.constant 0 : i32
    %c0_i32_0 = arith.constant 0 : i32
    return %arg0, %c0_i32 : i32, i32
  }
  func.func @transform_5(%arg0: i32) -> (i32, i32) {
    %c0_i32 = arith.constant 0 : i32
    %c0_i32_0 = arith.constant 0 : i32
    return %arg0, %c0_i32 : i32, i32
  }
  func.func @transform_6(%arg0: i32) -> (i32, i32) {
    %c0_i32 = arith.constant 0 : i32
    %c0_i32_0 = arith.constant 0 : i32
    return %arg0, %c0_i32 : i32, i32
  }
}

</mosaic_0001>

<llo_original>
// kernel: tpu_custom_call.1
$region0: #{tpu_custom_call.1}
  #allocation0 [shape = 'u32[]', space=smem, size = 0x4, offset = 0x4, fixed_abs, tag = 'smem constant byte address 0x4 - core index']
  #allocation1 [shape = 'u32[144,128]{1,0:T(1,128)}', space=vmem, size = 0x12000, scoped, tag = 'internal scratch']
  %s0 = inlined_call_operand.hbm [shape: f32[2,32], index: 0, kind: input, shape index: {}]
  %s1 = inlined_call_operand.vmem [shape: f32[1,32], index: 1, kind: input, shape index: {}]
  %s2 = inlined_call_operand.hbm [shape: f32[2,8,32], index: 2, kind: input, shape index: {}]
  %s3 = inlined_call_operand.hbm [shape: f32[2,8,64], index: 3, kind: input, shape index: {}]
  %s4 = inlined_call_operand.vmem [shape: s32[2,8], index: 4, kind: input, shape index: {}]
  %s5 = inlined_call_operand.hbm [shape: f32[2,128], index: 5, kind: output, shape index: {0}]
  %s6 = inlined_call_operand.hbm [shape: f32[2,128], index: 6, kind: output, shape index: {1}]
  %7 = xla_tuple %s5, %s6
  %s8 = sld [smem:[#allocation0]]
  $region50: #{tpu_custom_call.1} parent=0
    _
  %s10 = ssub.s32 1, %s8
  %s11 = scalar_select 0, %s10, %s8
  $region1: #{tpu_custom_call.1} parent=0
    #allocation2 [shape = 'u8[1024]{0}', space=vmem, size = 0x400, scoped, tag = 'input window, operand 0, single buffered']
    #allocation3 [shape = 's32[1]{0}', space=sflag, size = 0x4, scoped, tag = 'scoped memory for tpu_custom_call.1']
    #allocation4 [shape = 's32[1]{0}', space=sflag, size = 0x4, scoped, tag = 'scoped memory for tpu_custom_call.1']
    #allocation5 [shape = 'u8[8192]{0}', space=vmem, size = 0x2000, scoped, tag = 'input window, operand 2, single buffered']
    #allocation6 [shape = 's32[1]{0}', space=sflag, size = 0x4, scoped, tag = 'scoped memory for tpu_custom_call.1']
    #allocation7 [shape = 'u8[8192]{0}', space=vmem, size = 0x2000, scoped, tag = 'input window, operand 3, single buffered']
    #allocation8 [shape = 'u8[1024]{0}', space=vmem, size = 0x400, scoped, tag = 'output window, operand 0, single buffered']
    #allocation9 [shape = 'u8[1024]{0}', space=vmem, size = 0x400, scoped, tag = 'output window, operand 1, single buffered']
    #allocation10 [shape = 's32[1]{0}', space=sflag, size = 0x4, scoped, tag = 'scoped memory for tpu_custom_call.1']
    %12 = vsyncpa [#allocation3], 0
    %13 = vsyncpa [#allocation6], 0
    %14 = vsyncpa [#allocation4], 0
    %15 = vsyncpa [#allocation10], 0
    // Predicated region
    $region2: #{tpu_custom_call.1} parent=1 // pred_check
      _
    $region3: #{tpu_custom_call.1} parent=1 // pred_check_branch
      %17 = sbr.rel (0) target = $region5
    $region4: #{tpu_custom_call.1} parent=1 // pred_region
      %s19 = ssub.s32 32, 32
      %20 = vsyncadd [#allocation3], %s19
      %s22 = sshll.u32 [#allocation2], 4
      %s23 = int_to_ptr.vmem [resolvable:$true] %s22
      %25 = dma.hbm_to_vmem [thread:$0]  %s0, 32, %s23, [#allocation3]
    $region5: #{tpu_custom_call.1} parent=1 // pred_fallthru
      _
    // Predicated region
    $region6: #{tpu_custom_call.1} parent=1 // pred_check
      _
    $region7: #{tpu_custom_call.1} parent=1 // pred_check_branch
      %27 = sbr.rel (0) target = $region9
    $region8: #{tpu_custom_call.1} parent=1 // pred_region
      _
    $region9: #{tpu_custom_call.1} parent=1 // pred_fallthru
      _
    // Predicated region
    $region10: #{tpu_custom_call.1} parent=1 // pred_check
      _
    $region11: #{tpu_custom_call.1} parent=1 // pred_check_branch
      %29 = sbr.rel (0) target = $region13
    $region12: #{tpu_custom_call.1} parent=1 // pred_region
      %s31 = ssub.s32 256, 256
      %32 = vsyncadd [#allocation6], %s31
      %s33 = sshll.u32 [#allocation5], 4
      %s34 = int_to_ptr.vmem [resolvable:$true] %s33
      %39 = dma.hbm_to_vmem [thread:$0]  %s2, 256, %s34, [#allocation6], 128, 128, 8
    $region13: #{tpu_custom_call.1} parent=1 // pred_fallthru
      _
    // Predicated region
    $region14: #{tpu_custom_call.1} parent=1 // pred_check
      _
    $region15: #{tpu_custom_call.1} parent=1 // pred_check_branch
      %41 = sbr.rel (0) target = $region17
    $region16: #{tpu_custom_call.1} parent=1 // pred_region
      %s43 = ssub.s32 256, 256
      %44 = vsyncadd [#allocation6], %s43
      %s45 = sshll.u32 [#allocation7], 4
      %s46 = int_to_ptr.vmem [resolvable:$true] %s45
      %51 = dma.hbm_to_vmem [thread:$0]  %s3, 256, %s46, [#allocation6], 128, 128, 8
    $region17: #{tpu_custom_call.1} parent=1 // pred_fallthru
      _
    // Predicated region
    $region18: #{tpu_custom_call.1} parent=1 // pred_check
      _
    $region19: #{tpu_custom_call.1} parent=1 // pred_check_branch
      %53 = sbr.rel (0) target = $region21
    $region20: #{tpu_custom_call.1} parent=1 // pred_region
      _
    $region21: #{tpu_custom_call.1} parent=1 // pred_fallthru
      _
    // Predicated region
    $region22: #{tpu_custom_call.1} parent=1 // pred_check
      _
    $region23: #{tpu_custom_call.1} parent=1 // pred_check_branch
      %55 = sbr.rel (0) target = $region25
    $region24: #{tpu_custom_call.1} parent=1 // pred_region
      %56 = dma.done [#allocation3], 32
    $region25: #{tpu_custom_call.1} parent=1 // pred_fallthru
      _
    // Predicated region
    $region26: #{tpu_custom_call.1} parent=1 // pred_check
      _
    $region27: #{tpu_custom_call.1} parent=1 // pred_check_branch
      %58 = sbr.rel (0) target = $region29
    $region28: #{tpu_custom_call.1} parent=1 // pred_region
      %59 = dma.done [#allocation6], 256
    $region29: #{tpu_custom_call.1} parent=1 // pred_fallthru
      _
    // Predicated region
    $region30: #{tpu_custom_call.1} parent=1 // pred_check
      _
    $region31: #{tpu_custom_call.1} parent=1 // pred_check_branch
      %61 = sbr.rel (0) target = $region33
    $region32: #{tpu_custom_call.1} parent=1 // pred_region
      %62 = dma.done [#allocation6], 256
    $region33: #{tpu_custom_call.1} parent=1 // pred_fallthru
      _
    %v63 = vld [vmem:[#allocation2] sm:$0x3]
    %v64 = vld [vmem:[%s1] sm:$0x1]
    %v65 = vld [vmem:[#allocation5] sm:$0xff]
    %v66 = vld [vmem:[#allocation5 + $0x8] sm:$0xff]
    %v67 = vld [vmem:[#allocation7] sm:$0xff]
    %v68 = vld [vmem:[#allocation7 + $0x8] sm:$0xff]
    %v69 = vld [vmem:[%s4] sm:$0x3]
    %v72 = vunpack.c.l.s4 1966171168
    %v73 = vunpack.c.0.s8 %v72
    %v74 = vlaneseq
    %v75 = vshrl.u32 %v74, 7
    %v76 = vsub.s32 %v73, %v75
    %v77 = vrot.slane %v63, %v76
    %v78 = vcombine.high %v77, %v77
    %v80 = vunpack.c.l.s4 1966171168
    %v81 = vunpack.c.0.s8 %v80
    %v82 = vlaneseq
    %v83 = vshrl.u32 %v82, 7
    %v84 = vsub.s32 %v81, %v83
    %v85 = vrot.slane %v77, %v84
    %v87 = vunpack.c.l.s4 1966171168
    %v88 = vunpack.c.0.s8 %v87
    %v89 = vlaneseq
    %v90 = vshrl.u32 %v89, 7
    %v91 = vsub.s32 %v88, %v90
    %v92 = vrot.slane %v78, %v91
    %v93 = vlaneseq
    %v94 = vshrl.u32 %v93, 7
    %v95 = vsub.s32 0, %v94
    %v96 = vrot.slane %v85, %v95
    %v97 = vlaneseq
    %v98 = vshrl.u32 %v97, 7
    %v99 = vsub.s32 0, %v98
    %v100 = vrot.slane %v92, %v99
    %v103 = vadd.f32 %v96, %v65
    %v104 = vadd.f32 %v100, %v66
    %v105 = vtanh.pop %v103
    %v106 = vtanh.pop %v104
    %v108 = vlaneseq
    %v109 = vshrl.u32 %v108, 7
    %v110 = vsub.s32 0, %v109
    %v111 = vrot.slane %v64, %v110
    %v113 = vmul.f32 %v105, %v111
    %v114 = vmul.f32 %v106, %v111
    %vm115 = vcmask 261120
    %v116 = vsel %vm115, %v113, 0.0
    %117 = vadd.xlane.f32.xlu0 %v116
    %v118 = vpop.xlane.xlu0 %117
    %v119 = vsel %vm115, %v114, 0.0
    %120 = vadd.xlane.f32.xlu0 %v119
    %v121 = vpop.xlane.xlu0 %120
    %vm122 = vcmp.eq.s32.totalorder %v69, 0
    %v125 = vlaneseq
    %v126 = vand.u32 %v125, 127
    %v127 = vlaneseq
    %v128 = vshrl.u32 %v127, 7
    %v129 = vsub.s32 %v126, %v128
    %v130 = vrot.slane %v118, %v129
    %v131 = vlaneseq
    %v132 = vshrl.u32 %v131, 7
    %v133 = vsub.s32 %v126, %v132
    %v134 = vrot.slane %v121, %v133
    %vm135 = vcmask 1041409
    %v136 = vsel %vm135, %v134, %v130
    %v138 = vsel %vm122, -inf, %v136
    %vm139 = vcmask 58368
    %v140 = vsel %vm139, %v138, -inf
    %141 = vmax.xlane.f32.xlu0 %v140
    %v142 = vpop.xlane.xlu0 %141
    %v143 = vsub.f32 %v138, %v142
    %v144 = vmul.f32 %v143, 1.442695
    %v145 = vpow.pop %v144
    %v146 = vsel %vm139, %v145, 0.0
    %147 = vadd.xlane.f32.xlu0 %v146
    %v148 = vpop.xlane.xlu0 %147
    %v149 = vrcp.pop %v148
    %v150 = vmul.f32 %v145, %v149
    %v151 = vlaneseq
    %v152 = vshrl.u32 %v151, 7
    %v153 = vsub.s32 0, %v152
    %v154 = vrot.slane %v150, %v153
    %156 = vbcast.lane.b32.xlu0 %v154, 256
    %v157 = vpop.permute.xlu0 %156
    %v158 = vlaneseq
    %v159 = vshrl.u32 %v158, 7
    %v160 = vsub.s32 1, %v159
    %v161 = vrot.slane %v150, %v160
    %163 = vbcast.lane.b32.xlu0 %v161, 256
    %v164 = vpop.permute.xlu0 %163
    %v165 = vmul.f32 %v157, %v67
    %v166 = vmul.f32 %v164, %v68
    %vm167 = vcmask 523264
    %v168 = vsel %vm167, %v165, 0.0
    %v169 = vrot.slane %v168, 4
    %v170 = vadd.f32 %v168, %v169
    %v171 = vrot.slane %v170, 2
    %v172 = vadd.f32 %v170, %v171
    %v173 = vrot.slane %v172, 1
    %v174 = vadd.f32 %v172, %v173
    %v175 = vsel %vm167, %v166, 0.0
    %v176 = vrot.slane %v175, 4
    %v177 = vadd.f32 %v175, %v176
    %v178 = vrot.slane %v177, 2
    %v179 = vadd.f32 %v177, %v178
    %v180 = vrot.slane %v179, 1
    %v181 = vadd.f32 %v179, %v180
    %182 = vst [vmem:[#allocation9] sm:$0x3] 0.0
    %183 = vst.msk [vmem:[#allocation9] sm:$0x3] %vm139, %v150
    %184 = vst [vmem:[#allocation8] sm:$0x3] 0.0
    %v187 = vsel %vm135, %v181, %v174
    %vm189 = vcmask 517120
    %190 = vst.msk [vmem:[#allocation8] sm:$0x3] %vm189, %v187
    // Predicated region
    $region34: #{tpu_custom_call.1} parent=1 // pred_check
      _
    $region35: #{tpu_custom_call.1} parent=1 // pred_check_branch
      %192 = sbr.rel (0) target = $region37
    $region36: #{tpu_custom_call.1} parent=1 // pred_region
      %s194 = ssub.s32 32, 32
      %195 = vsyncadd [#allocation4], %s194
      %s197 = sshll.u32 [#allocation8], 4
      %s198 = int_to_ptr.vmem [resolvable:$true] %s197
      %200 = dma.vmem_to_hbm [thread:$0]  %s198, 32, %s5, [#allocation4]
    $region37: #{tpu_custom_call.1} parent=1 // pred_fallthru
      _
    // Predicated region
    $region38: #{tpu_custom_call.1} parent=1 // pred_check
      _
    $region39: #{tpu_custom_call.1} parent=1 // pred_check_branch
      %202 = sbr.rel (0) target = $region41
    $region40: #{tpu_custom_call.1} parent=1 // pred_region
      %s204 = ssub.s32 32, 32
      %205 = vsyncadd [#allocation10], %s204
      %s207 = sshll.u32 [#allocation9], 4
      %s208 = int_to_ptr.vmem [resolvable:$true] %s207
      %210 = dma.vmem_to_hbm [thread:$0]  %s208, 32, %s6, [#allocation10]
    $region41: #{tpu_custom_call.1} parent=1 // pred_fallthru
      _
    // Predicated region
    $region42: #{tpu_custom_call.1} parent=1 // pred_check
      _
    $region43: #{tpu_custom_call.1} parent=1 // pred_check_branch
      %212 = sbr.rel (0) target = $region45
    $region44: #{tpu_custom_call.1} parent=1 // pred_region
      %213 = dma.done [#allocation4], 32
    $region45: #{tpu_custom_call.1} parent=1 // pred_fallthru
      _
    // Predicated region
    $region46: #{tpu_custom_call.1} parent=1 // pred_check
      _
    $region47: #{tpu_custom_call.1} parent=1 // pred_check_branch
      %215 = sbr.rel (0) target = $region49
    $region48: #{tpu_custom_call.1} parent=1 // pred_region
      %216 = dma.done [#allocation10], 32
    $region49: #{tpu_custom_call.1} parent=1 // pred_fallthru
      _
    %217 = vsyncpa [#allocation3], 1
    %218 = vsyncpa [#allocation6], 1
    %219 = vsyncpa [#allocation4], 1
    %220 = vsyncpa [#allocation10], 1

</llo_original>
